<compile_context>
chip_gen: v5e
topology: v5e:2x2
jax: 0.10.0
libtpu: 0.0.40
codegen_flags: <defaults>
</compile_context>

<pallas_src>
import functools

import jax
import jax.numpy as jnp
from jax.experimental import pallas as pl
from jax.experimental.pallas import tpu as pltpu

_LANE = 128


def _round_up(x, m):
    return (x + m - 1) // m * m


def _round_down(x, m):
    return (x // m) * m


def _hypernet_kernel(*refs, clamp_range, with_instance):
    """One (batch, P-tile) block: fused concat-matmul -> ReLU -> matmul -> clamp."""
    if with_instance:
        xg_ref, xi_ref, w1g_ref, w1i_ref, b1_ref, w2_ref, b2_ref, out_ref = refs
    else:
        xg_ref, w1g_ref, b1_ref, w2_ref, b2_ref, out_ref = refs
        xi_ref = w1i_ref = None

    # Layer 1 (tiny, B x H).  Recomputed per P-tile on purpose: the few MXU
    # pushes are fully hidden under the W2 tile DMA, and it keeps the
    # "parallel" P axis correct on megacore v7x (a pl.when(program_id==0)
    # scratch init would never fire on the second TensorCore's grid shard).
    h = jnp.dot(xg_ref[...], w1g_ref[...], preferred_element_type=jnp.float32)
    if with_instance:
        h = h + jnp.dot(xi_ref[...], w1i_ref[...], preferred_element_type=jnp.float32)
    h = jnp.maximum(h + b1_ref[...], 0.0)          # b1 is (1, H): broadcasts over batch

    # Layer 2: MXU operands in the (possibly narrow) W2 dtype, f32 accumulation.
    y = jnp.dot(h.astype(w2_ref.dtype), w2_ref[...], preferred_element_type=jnp.float32)
    y = y + b2_ref[...]                            # b2 is (1, TN), f32
    out_ref[...] = jnp.clip(y, -clamp_range, clamp_range).astype(out_ref.dtype)


def prepare_params(params, *, compute_dtype=jnp.bfloat16):
    """One-time parameter prep.  Call OUTSIDE the per-step / jitted forward.

    * Casts W2 to the streaming dtype once (default bf16: halves HBM bytes on
      the tensor the kernel is bandwidth-bound on).
    * Pre-pads W2 / b2 to a multiple of 128 lanes once, so the per-call
      forward never materializes an extra HBM copy of the dominant tensor.
    """
    compute_dtype = jnp.dtype(compute_dtype)
    w1, b1, w2, b2 = params["w1"], params["b1"], params["w2"], params["b2"]
    H, P = w2.shape
    P_pad = _round_up(P, _LANE)
    w2p = w2.astype(compute_dtype)
    b2p = b2.reshape(1, P).astype(jnp.float32)
    if P_pad != P:
        w2p = jnp.pad(w2p, ((0, 0), (0, P_pad - P)))
        b2p = jnp.pad(b2p, ((0, 0), (0, P_pad - P)))
    return {
        "w1": w1,
        "b1": b1.reshape(1, H).astype(jnp.float32),
        "w2": w2p,
        "b2": b2p,
        "peft_param_count": int(P),
        "compute_dtype": compute_dtype,
    }


def hierarchical_hypernetwork_forward(
    global_features,
    instance_features,
    params,
    *,
    use_instance: bool = True,
    clamp_range: float = 0.05,
    out_dtype=jnp.float32,
    max_tile_p: int = 4096,
    vmem_budget_bytes: int = 40 << 20,   # conservative for v7x's 64 MiB VMEM
    w2_buffers: int = 2,
):
    """Pallas-backed equivalent of HierarchicalHypernetwork.forward."""
    if "peft_param_count" not in params:
        # Raw torch-style params: prep per call (costs an extra HBM round trip
        # of W2 — prefer calling prepare_params() once up front and reusing it).
        params = prepare_params(params)

    w1 = params["w1"]
    b1r = params["b1"]
    w2 = params["w2"]
    b2r = params["b2"]
    P = int(params["peft_param_count"])
    compute_dtype = jnp.dtype(params["compute_dtype"])
    out_dtype = jnp.dtype(out_dtype)

    B, Dg = global_features.shape
    H, P_pad = w2.shape

    if use_instance:
        if instance_features is None:
            raise ValueError("instance_features required but None provided")
        Di = instance_features.shape[-1]
        assert w1.shape[0] == Dg + Di, "w1 rows must equal Dg + Di"
    else:
        Di = 0
        assert w1.shape[0] == Dg, "w1 rows must equal Dg"

    # Operand prep.  The activation concat is fused away by splitting W1 rows
    # (x @ W1 == xg @ W1[:Dg] + xi @ W1[Dg:]).  All of these are tiny.
    xg = global_features.astype(compute_dtype)
    w1g = w1[:Dg].astype(compute_dtype)
    if use_instance:
        xi = instance_features.astype(compute_dtype)
        w1i = w1[Dg:].astype(compute_dtype)
        inputs = (xg, xi, w1g, w1i, b1r, w2, b2r)
    else:
        inputs = (xg, w1g, b1r, w2, b2r)

    # ---- P-tile selection: as wide as possible within a VMEM budget. -------
    itm_w2 = compute_dtype.itemsize
    itm_out = out_dtype.itemsize
    n_buf = max(2, int(w2_buffers))
    # Resident (non-streamed) blocks, double-buffered by the pipeline.
    resident = 2 * ((B * Dg + B * Di + (Dg + Di) * H) * itm_w2 + H * 4)
    margin = 2 << 20
    per_lane = n_buf * (H * itm_w2 + 4 + B * itm_out)   # w2 + b2(f32) + out, per buffer
    tile_budget = max(_LANE, _round_down((vmem_budget_bytes - resident - margin) // per_lane, _LANE))
    tile_p = min(_round_up(max_tile_p, _LANE), tile_budget, P_pad)
    n_tiles = pl.cdiv(P_pad, tile_p)

    kernel = functools.partial(
        _hypernet_kernel, clamp_range=float(clamp_range), with_instance=use_instance
    )

    flops = 2 * B * ((Dg + Di) * H + H * P_pad)
    bytes_accessed = sum(int(a.size) * a.dtype.itemsize for a in inputs) + B * P_pad * itm_out
    cost = pl.CostEstimate(flops=flops, transcendentals=0, bytes_accessed=bytes_accessed)

    out_shape = jax.ShapeDtypeStruct((B, P_pad), out_dtype)

    if n_tiles == 1:
        # Single fully-resident block: grid-less call (no pipeline prologue).
        vmem = pl.BlockSpec(memory_space=pltpu.MemorySpace.VMEM)
        out = pl.pallas_call(
            kernel,
            out_shape=out_shape,
            in_specs=[vmem] * len(inputs),
            out_specs=vmem,
            cost_estimate=cost,
        )(*inputs)
    else:
        def _fixed(j):
            return (0, 0)

        def _ptile(j):
            return (0, j)

        stream_kwargs = {}
        if n_buf > 2:
            stream_kwargs = dict(pipeline_mode=pl.Buffered(n_buf))
        w2_spec = pl.BlockSpec((H, tile_p), _ptile, **stream_kwargs)
        b2_spec = pl.BlockSpec((1, tile_p), _ptile, **stream_kwargs)

        if use_instance:
            in_specs = [
                pl.BlockSpec((B, Dg), _fixed),
                pl.BlockSpec((B, Di), _fixed),
                pl.BlockSpec((Dg, H), _fixed),
                pl.BlockSpec((Di, H), _fixed),
                pl.BlockSpec((1, H), _fixed),
                w2_spec,
                b2_spec,
            ]
        else:
            in_specs = [
                pl.BlockSpec((B, Dg), _fixed),
                pl.BlockSpec((Dg, H), _fixed),
                pl.BlockSpec((1, H), _fixed),
                w2_spec,
                b2_spec,
            ]

        needed = resident + n_buf * tile_p * (H * itm_w2 + 4 + B * itm_out) + margin
        vmem_limit = int(min(max(needed, 16 << 20), 48 << 20))

        out = pl.pallas_call(
            kernel,
            out_shape=out_shape,
            grid=(n_tiles,),
            in_specs=in_specs,
            out_specs=pl.BlockSpec((B, tile_p), _ptile),
            cost_estimate=cost,
            compiler_params=pltpu.CompilerParams(
                dimension_semantics=("parallel",),   # shards P tiles across TCs on v7x
                vmem_limit_bytes=vmem_limit,
            ),
        )(*inputs)

    return out[:, :P] if P_pad != P else out


def init_params(key, global_input_dim, instance_input_dim, hidden_dim,
                peft_param_count, *, use_instance=True):
    """Deterministic synthetic parameters (torch-Linear-like uniform init)."""
    in_dim = global_input_dim + (instance_input_dim if use_instance else 0)
    k1, k2, k3, k4 = jax.random.split(key, 4)
    bound1 = 1.0 / jnp.sqrt(in_dim)
    bound2 = 1.0 / jnp.sqrt(hidden_dim)
    return {
        "w1": jax.random.uniform(k1, (in_dim, hidden_dim), jnp.float32, -bound1, bound1),
        "b1": jax.random.uniform(k2, (hidden_dim,), jnp.float32, -bound1, bound1),
        "w2": jax.random.uniform(k3, (hidden_dim, peft_param_count), jnp.float32, -bound2, bound2),
        "b2": jax.random.uniform(k4, (peft_param_count,), jnp.float32, -bound2, bound2),
    }


def _reference(global_features, instance_features, params, *, use_instance=True,
               clamp_range=0.05):
    """Plain-JAX reference of the torch forward for verification (f32)."""
    if use_instance:
        x = jnp.concatenate([global_features, instance_features], axis=-1)
    else:
        x = global_features
    h = jnp.maximum(x @ params["w1"] + params["b1"], 0.0)
    y = h @ params["w2"] + params["b2"]
    return jnp.clip(y, -clamp_range, clamp_range)


if __name__ == "__main__":
    B, DG, DI, H = 8, 16, 16, 32          # B=8 fills the f32 sublanes of a vreg
    CLAMP = 0.05

    key = jax.random.PRNGKey(0)
    kg, ki, kp = jax.random.split(key, 3)
    gfeat = jax.random.normal(kg, (B, DG), jnp.float32)
    ifeat = jax.random.normal(ki, (B, DI), jnp.float32)

    # Case 1: P=128, bf16 W2 stream (default), single resident block (grid-less).
    raw1 = init_params(kp, DG, DI, H, 128, use_instance=True)
    prep1 = prepare_params(raw1)                      # one-time cast/pad, bf16
    o1 = jax.block_until_ready(
        hierarchical_hypernetwork_forward(gfeat, ifeat, prep1, clamp_range=CLAMP))
    r1 = _reference(gfeat, ifeat, raw1, clamp_range=CLAMP)
    assert o1.shape == (B, 128)
    assert jnp.allclose(o1, r1, atol=2e-2, rtol=0), "case1 (bf16) mismatch vs reference"

    # Case 2: P=300 (non-multiple of 128), f32 escape hatch, small max_tile_p
    # forces the tiled grid path with a ragged (masked) last tile.
    raw2 = init_params(jax.random.fold_in(kp, 1), DG, DI, H, 300, use_instance=True)
    prep2 = prepare_params(raw2, compute_dtype=jnp.float32)
    o2 = jax.block_until_ready(
        hierarchical_hypernetwork_forward(gfeat, ifeat, prep2, clamp_range=CLAMP,
                                          max_tile_p=256))
    r2 = _reference(gfeat, ifeat, raw2, clamp_range=CLAMP)
    assert o2.shape == (B, 300)
    assert jnp.allclose(o2, r2, atol=1e-5, rtol=1e-5), "case2 (f32/ragged) mismatch vs reference"

    # Case 3: use_instance=False, bf16 stream + bf16 output, forced 2-tile grid.
    raw3 = init_params(jax.random.fold_in(kp, 2), DG, 0, H, 256, use_instance=False)
    prep3 = prepare_params(raw3)                      # bf16 default
    o3 = jax.block_until_ready(
        hierarchical_hypernetwork_forward(
            gfeat, None, prep3, use_instance=False, clamp_range=CLAMP,
            out_dtype=jnp.bfloat16, max_tile_p=128))
    r3 = _reference(gfeat, None, raw3, use_instance=False, clamp_range=CLAMP)
    assert o3.shape == (B, 256) and o3.dtype == jnp.bfloat16
    assert jnp.allclose(o3.astype(jnp.float32), r3, atol=2e-2, rtol=0), \
        "case3 (bf16 out) mismatch vs reference"

    print("KERNEL_OK")
</pallas_src>

<mosaic_0001>
module attributes {stable_mosaic.version = 11 : i64} {
  func.func @_hypernet_kernel(%arg0: memref<8x16xbf16, #tpu.memory_space<vmem>>, %arg1: memref<8x16xbf16, #tpu.memory_space<vmem>>, %arg2: memref<16x32xbf16, #tpu.memory_space<vmem>>, %arg3: memref<16x32xbf16, #tpu.memory_space<vmem>>, %arg4: memref<1x32xf32, #tpu.memory_space<vmem>>, %arg5: memref<32x128xbf16, #tpu.memory_space<vmem>>, %arg6: memref<1x128xf32, #tpu.memory_space<vmem>>, %arg7: memref<8x128xf32, #tpu.memory_space<vmem>>) attributes {dimension_semantics = [], scalar_prefetch = 0 : i64, scratch_operands = 0 : i64, tpu.core_type = #tpu.core_type<tc>} {
    %c0 = arith.constant 0 : index
    %c0_0 = arith.constant 0 : index
    %0 = vector.load %arg0[%c0, %c0_0] : memref<8x16xbf16, #tpu.memory_space<vmem>>, vector<8x16xbf16>
    %c0_1 = arith.constant 0 : index
    %c0_2 = arith.constant 0 : index
    %1 = vector.load %arg2[%c0_1, %c0_2] : memref<16x32xbf16, #tpu.memory_space<vmem>>, vector<16x32xbf16>
    %cst = arith.constant dense<0.000000e+00> : vector<8x32xf32>
    %2 = tpu.matmul %0, %1, %cst {dimension_numbers = #tpu.dot_dimension_numbers<[1], [0], [0], [1], [0, 0, 1, 1], [], []>} : vector<8x16xbf16>, vector<16x32xbf16>, vector<8x32xf32> -> vector<8x32xf32>
    %c0_3 = arith.constant 0 : index
    %c0_4 = arith.constant 0 : index
    %3 = vector.load %arg1[%c0_3, %c0_4] : memref<8x16xbf16, #tpu.memory_space<vmem>>, vector<8x16xbf16>
    %c0_5 = arith.constant 0 : index
    %c0_6 = arith.constant 0 : index
    %4 = vector.load %arg3[%c0_5, %c0_6] : memref<16x32xbf16, #tpu.memory_space<vmem>>, vector<16x32xbf16>
    %cst_7 = arith.constant dense<0.000000e+00> : vector<8x32xf32>
    %5 = tpu.matmul %3, %4, %cst_7 {dimension_numbers = #tpu.dot_dimension_numbers<[1], [0], [0], [1], [0, 0, 1, 1], [], []>} : vector<8x16xbf16>, vector<16x32xbf16>, vector<8x32xf32> -> vector<8x32xf32>
    %6 = arith.addf %2, %5 : vector<8x32xf32>
    %c0_8 = arith.constant 0 : index
    %c0_9 = arith.constant 0 : index
    %7 = vector.load %arg4[%c0_8, %c0_9] : memref<1x32xf32, #tpu.memory_space<vmem>>, vector<1x32xf32>
    %8 = vector.broadcast %7 : vector<1x32xf32> to vector<8x32xf32>
    %9 = arith.addf %6, %8 : vector<8x32xf32>
    %cst_10 = arith.constant 0.000000e+00 : f32
    %10 = vector.broadcast %cst_10 : f32 to vector<8x32xf32>
    %11 = arith.maximumf %9, %10 : vector<8x32xf32>
    %12 = arith.truncf %11 : vector<8x32xf32> to vector<8x32xbf16>
    %c0_11 = arith.constant 0 : index
    %c0_12 = arith.constant 0 : index
    %13 = vector.load %arg5[%c0_11, %c0_12] : memref<32x128xbf16, #tpu.memory_space<vmem>>, vector<32x128xbf16>
    %cst_13 = arith.constant dense<0.000000e+00> : vector<8x128xf32>
    %14 = tpu.matmul %12, %13, %cst_13 {dimension_numbers = #tpu.dot_dimension_numbers<[1], [0], [0], [1], [0, 0, 1, 1], [], []>} : vector<8x32xbf16>, vector<32x128xbf16>, vector<8x128xf32> -> vector<8x128xf32>
    %c0_14 = arith.constant 0 : index
    %c0_15 = arith.constant 0 : index
    %15 = vector.load %arg6[%c0_14, %c0_15] : memref<1x128xf32, #tpu.memory_space<vmem>>, vector<1x128xf32>
    %16 = vector.broadcast %15 : vector<1x128xf32> to vector<8x128xf32>
    %17 = arith.addf %14, %16 : vector<8x128xf32>
    %cst_16 = arith.constant -5.000000e-02 : f32
    %cst_17 = arith.constant 5.000000e-02 : f32
    %18 = vector.broadcast %cst_16 : f32 to vector<8x128xf32>
    %19 = arith.maximumf %18, %17 : vector<8x128xf32>
    %20 = vector.broadcast %cst_17 : f32 to vector<8x128xf32>
    %21 = arith.minimumf %20, %19 : vector<8x128xf32>
    %c0_18 = arith.constant 0 : index
    %c0_19 = arith.constant 0 : index
    %22 = vector.load %arg7[%c0_18, %c0_19] : memref<8x128xf32, #tpu.memory_space<vmem>>, vector<8x128xf32>
    tpu.vector_store %arg7[%c0_18, %c0_19], %21 {strides = array<i32>} : memref<8x128xf32, #tpu.memory_space<vmem>>, vector<8x128xf32>,
    return
  }
}

</mosaic_0001>

<llo_original>
// kernel: tpu_custom_call.1
$region0: #{tpu_custom_call.1}
  #allocation0 [shape = 'u32[]', space=smem, size = 0x4, offset = 0x4, fixed_abs, tag = 'smem constant byte address 0x4 - core index']
  #allocation1 [shape = 'u32[72,128]{1,0:T(1,128)}', space=vmem, size = 0x9000, scoped, tag = 'internal scratch']
  %s0 = inlined_call_operand.hbm [shape: bf16[8,16], index: 0, kind: input, shape index: {}]
  %s1 = inlined_call_operand.hbm [shape: bf16[8,16], index: 1, kind: input, shape index: {}]
  %s2 = inlined_call_operand.hbm [shape: bf16[16,32], index: 2, kind: input, shape index: {}]
  %s3 = inlined_call_operand.hbm [shape: bf16[16,32], index: 3, kind: input, shape index: {}]
  %s4 = inlined_call_operand.vmem [shape: f32[1,32], index: 4, kind: input, shape index: {}]
  %s5 = inlined_call_operand.hbm [shape: bf16[32,128], index: 5, kind: input, shape index: {}]
  %s6 = inlined_call_operand.vmem [shape: f32[1,128], index: 6, kind: input, shape index: {}]
  %s7 = inlined_call_operand.hbm [shape: f32[8,128], index: 7, kind: output, shape index: {}]
  %s8 = sld [smem:[#allocation0]]
  $region58: #{tpu_custom_call.1} parent=0
    _
  %s10 = ssub.s32 1, %s8
  %s11 = scalar_select 0, %s10, %s8
  $region1: #{tpu_custom_call.1} parent=0
    #allocation2 [shape = 'u8[2048]{0}', space=vmem, size = 0x800, scoped, tag = 'input window, operand 0, single buffered']
    #allocation3 [shape = 's32[1]{0}', space=sflag, size = 0x4, scoped, tag = 'scoped memory for tpu_custom_call.1']
    #allocation4 [shape = 's32[1]{0}', space=sflag, size = 0x4, scoped, tag = 'scoped memory for tpu_custom_call.1']
    #allocation5 [shape = 'u8[2048]{0}', space=vmem, size = 0x800, scoped, tag = 'input window, operand 1, single buffered']
    #allocation6 [shape = 's32[1]{0}', space=sflag, size = 0x4, scoped, tag = 'scoped memory for tpu_custom_call.1']
    #allocation7 [shape = 'u8[4096]{0}', space=vmem, size = 0x1000, scoped, tag = 'input window, operand 2, single buffered']
    #allocation8 [shape = 'u8[4096]{0}', space=vmem, size = 0x1000, scoped, tag = 'input window, operand 3, single buffered']
    #allocation9 [shape = 's32[1]{0}', space=sflag, size = 0x4, scoped, tag = 'scoped memory for tpu_custom_call.1']
    #allocation10 [shape = 'u8[8192]{0}', space=vmem, size = 0x2000, scoped, tag = 'input window, operand 5, single buffered']
    #allocation11 [shape = 'u8[4096]{0}', space=vmem, size = 0x1000, scoped, tag = 'output window, operand 0, single buffered']
    %12 = vsyncpa [#allocation3], 0
    %13 = vsyncpa [#allocation6], 0
    %14 = vsyncpa [#allocation9], 0
    %15 = vsyncpa [#allocation4], 0
    // Predicated region
    $region2: #{tpu_custom_call.1} parent=1 // pred_check
      _
    $region3: #{tpu_custom_call.1} parent=1 // pred_check_branch
      %17 = sbr.rel (0) target = $region5
    $region4: #{tpu_custom_call.1} parent=1 // pred_region
      %19 = vsyncadd [#allocation3], 0
      %s21 = sshll.u32 %s0, 4
      %s22 = int_to_ptr.hbm [resolvable:$true] %s21
      %s23 = sshll.u32 [#allocation2], 4
      %s24 = int_to_ptr.vmem [resolvable:$true] %s23
      %26 = dma.hbm_to_vmem [thread:$0]  %s22, 64, %s24, [#allocation3]
    $region5: #{tpu_custom_call.1} parent=1 // pred_fallthru
      _
    // Predicated region
    $region6: #{tpu_custom_call.1} parent=1 // pred_check
      _
    $region7: #{tpu_custom_call.1} parent=1 // pred_check_branch
      %28 = sbr.rel (0) target = $region9
    $region8: #{tpu_custom_call.1} parent=1 // pred_region
      %30 = vsyncadd [#allocation6], 0
      %s32 = sshll.u32 %s1, 4
      %s33 = int_to_ptr.hbm [resolvable:$true] %s32
      %s34 = sshll.u32 [#allocation5], 4
      %s35 = int_to_ptr.vmem [resolvable:$true] %s34
      %37 = dma.hbm_to_vmem [thread:$0]  %s33, 64, %s35, [#allocation6]
    $region9: #{tpu_custom_call.1} parent=1 // pred_fallthru
      _
    // Predicated region
    $region10: #{tpu_custom_call.1} parent=1 // pred_check
      _
    $region11: #{tpu_custom_call.1} parent=1 // pred_check_branch
      %39 = sbr.rel (0) target = $region13
    $region12: #{tpu_custom_call.1} parent=1 // pred_region
      %41 = vsyncadd [#allocation6], 0
      %s42 = sshll.u32 %s2, 4
      %s43 = int_to_ptr.hbm [resolvable:$true] %s42
      %s44 = sshll.u32 [#allocation7], 4
      %s45 = int_to_ptr.vmem [resolvable:$true] %s44
      %50 = dma.hbm_to_vmem [thread:$0]  %s43, 128, %s45, [#allocation6], 64, 64, 4
    $region13: #{tpu_custom_call.1} parent=1 // pred_fallthru
      _
    // Predicated region
    $region14: #{tpu_custom_call.1} parent=1 // pred_check
      _
    $region15: #{tpu_custom_call.1} parent=1 // pred_check_branch
      %52 = sbr.rel (0) target = $region17
    $region16: #{tpu_custom_call.1} parent=1 // pred_region
      %54 = vsyncadd [#allocation9], 0
      %s55 = sshll.u32 %s3, 4
      %s56 = int_to_ptr.hbm [resolvable:$true] %s55
      %s57 = sshll.u32 [#allocation8], 4
      %s58 = int_to_ptr.vmem [resolvable:$true] %s57
      %63 = dma.hbm_to_vmem [thread:$0]  %s56, 128, %s58, [#allocation9], 64, 64, 4
    $region17: #{tpu_custom_call.1} parent=1 // pred_fallthru
      _
    // Predicated region
    $region18: #{tpu_custom_call.1} parent=1 // pred_check
      _
    $region19: #{tpu_custom_call.1} parent=1 // pred_check_branch
      %65 = sbr.rel (0) target = $region21
    $region20: #{tpu_custom_call.1} parent=1 // pred_region
      _
    $region21: #{tpu_custom_call.1} parent=1 // pred_fallthru
      _
    // Predicated region
    $region22: #{tpu_custom_call.1} parent=1 // pred_check
      _
    $region23: #{tpu_custom_call.1} parent=1 // pred_check_branch
      %67 = sbr.rel (0) target = $region25
    $region24: #{tpu_custom_call.1} parent=1 // pred_region
      %69 = vsyncadd [#allocation9], 0
      %s70 = sshll.u32 %s5, 4
      %s71 = int_to_ptr.hbm [resolvable:$true] %s70
      %s72 = sshll.u32 [#allocation10], 4
      %s73 = int_to_ptr.vmem [resolvable:$true] %s72
      %78 = dma.hbm_to_vmem [thread:$0]  %s71, 256, %s73, [#allocation9], 64, 64, 4
    $region25: #{tpu_custom_call.1} parent=1 // pred_fallthru
      _
    // Predicated region
    $region26: #{tpu_custom_call.1} parent=1 // pred_check
      _
    $region27: #{tpu_custom_call.1} parent=1 // pred_check_branch
      %80 = sbr.rel (0) target = $region29
    $region28: #{tpu_custom_call.1} parent=1 // pred_region
      _
    $region29: #{tpu_custom_call.1} parent=1 // pred_fallthru
      _
    // Predicated region
    $region30: #{tpu_custom_call.1} parent=1 // pred_check
      _
    $region31: #{tpu_custom_call.1} parent=1 // pred_check_branch
      %82 = sbr.rel (0) target = $region33
    $region32: #{tpu_custom_call.1} parent=1 // pred_region
      %84 = dma.done [#allocation3], 64
    $region33: #{tpu_custom_call.1} parent=1 // pred_fallthru
      _
    // Predicated region
    $region34: #{tpu_custom_call.1} parent=1 // pred_check
      _
    $region35: #{tpu_custom_call.1} parent=1 // pred_check_branch
      %86 = sbr.rel (0) target = $region37
    $region36: #{tpu_custom_call.1} parent=1 // pred_region
      %88 = dma.done [#allocation6], 64
    $region37: #{tpu_custom_call.1} parent=1 // pred_fallthru
      _
    // Predicated region
    $region38: #{tpu_custom_call.1} parent=1 // pred_check
      _
    $region39: #{tpu_custom_call.1} parent=1 // pred_check_branch
      %90 = sbr.rel (0) target = $region41
    $region40: #{tpu_custom_call.1} parent=1 // pred_region
      %92 = dma.done [#allocation6], 128
    $region41: #{tpu_custom_call.1} parent=1 // pred_fallthru
      _
    // Predicated region
    $region42: #{tpu_custom_call.1} parent=1 // pred_check
      _
    $region43: #{tpu_custom_call.1} parent=1 // pred_check_branch
      %94 = sbr.rel (0) target = $region45
    $region44: #{tpu_custom_call.1} parent=1 // pred_region
      %96 = dma.done [#allocation9], 128
    $region45: #{tpu_custom_call.1} parent=1 // pred_fallthru
      _
    // Predicated region
    $region46: #{tpu_custom_call.1} parent=1 // pred_check
      _
    $region47: #{tpu_custom_call.1} parent=1 // pred_check_branch
      %98 = sbr.rel (0) target = $region49
    $region48: #{tpu_custom_call.1} parent=1 // pred_region
      %100 = dma.done [#allocation9], 256
    $region49: #{tpu_custom_call.1} parent=1 // pred_fallthru
      _
    %v102 = vld [vmem:[#allocation2] sm:$0xf]
    %v103 = vld [vmem:[#allocation7] sm:$0xf]
    %v104 = vld [vmem:[#allocation7 + $0x4] sm:$0xf]
    %v105 = vld [vmem:[#allocation5] sm:$0xf]
    %v106 = vld [vmem:[#allocation8] sm:$0xf]
    %v107 = vld [vmem:[#allocation8 + $0x4] sm:$0xf]
    %v110 = vunpack.c.l.b16 %v106
    %v111 = vunpack.c.l.b16 %v107
    %v112 = vpack.c.b16 %v111, %v110
    %vm114 = vcmask 130048
    %v116 = vsel %vm114, %v105, 0
    %118 = vmatpush.bf16.msra.mxu0 0
    %119 = vmatpush.bf16.msra.mxu0 0
    %120 = vmatpush.bf16.msra.mxu0 0
    %121 = vmatpush.bf16.msra.mxu0 0
    %122 = vmatpush.bf16.msra.mxu0 0
    %123 = vmatpush.bf16.msra.mxu0 0
    %124 = vmatpush.bf16.msra.mxu0 0
    %125 = vmatpush.bf16.msra.mxu0 %v112
    %126 = vmatmul.bf16.gmra.mxu0 %v116
    %v127 = vpop.f32.mrf.mxu0
    %v128 = vadd.f32 0.0, %v127
    %v129 = vpop.f32.mrf.mxu0
    %130 = vdwg.mxu0
    %v133 = vunpack.c.l.b16 %v103
    %v134 = vunpack.c.l.b16 %v104
    %v135 = vpack.c.b16 %v134, %v133
    %v138 = vsel %vm114, %v102, 0
    %140 = vmatpush.bf16.msra.mxu0 0
    %141 = vmatpush.bf16.msra.mxu0 0
    %142 = vmatpush.bf16.msra.mxu0 0
    %143 = vmatpush.bf16.msra.mxu0 0
    %144 = vmatpush.bf16.msra.mxu0 0
    %145 = vmatpush.bf16.msra.mxu0 0
    %146 = vmatpush.bf16.msra.mxu0 0
    %147 = vmatpush.bf16.msra.mxu0 %v135
    %148 = vmatmul.bf16.gmra.mxu0 %v138
    %v149 = vpop.f32.mrf.mxu0
    %v150 = vadd.f32 %v128, %v149
    %v151 = vpop.f32.mrf.mxu0
    %152 = vdwg.mxu0
    %v153 = vld [vmem:[%s4] sm:$0x1]
    %v155 = vperm.slane %v153, 0
    %v157 = vadd.f32 %v150, %v155
    %v158 = vmax.f32 %v157, 0.0
    %v159 = vpack.c.bf16 %v158, %v158
    %v160 = vld [vmem:[#allocation10] sm:$0xf]
    %v161 = vld [vmem:[#allocation10 + $0x4] sm:$0xf]
    %v162 = vld [vmem:[#allocation10 + $0x8] sm:$0xf]
    %v163 = vld [vmem:[#allocation10 + $0xc] sm:$0xf]
    %v164 = vld [vmem:[%s6] sm:$0x1]
    %v166 = vperm.slane %v164, 0
    %v172 = vunpack.c.l.b16 %v160
    %v173 = vunpack.c.l.b16 %v161
    %v174 = vunpack.c.l.b16 %v162
    %v175 = vunpack.c.l.b16 %v163
    %v176 = vpack.c.b16 %v173, %v172
    %v177 = vpack.c.b16 %v175, %v174
    %vm180 = vcmask 261120
    %v182 = vsel %vm180, %v159, 0
    %184 = vmatpush.bf16.msra.mxu0 0
    %185 = vmatpush.bf16.msra.mxu0 0
    %186 = vmatpush.bf16.msra.mxu0 0
    %187 = vmatpush.bf16.msra.mxu0 0
    %188 = vmatpush.bf16.msra.mxu0 0
    %189 = vmatpush.bf16.msra.mxu0 0
    %190 = vmatpush.bf16.msra.mxu0 %v177
    %191 = vmatpush.bf16.msra.mxu0 %v176
    %192 = vmatmul.bf16.gmra.mxu0 %v182
    %v193 = vpop.f32.mrf.mxu0
    %v194 = vadd.f32 %v166, %v193
    %v195 = vpop.f32.mrf.mxu0
    %196 = vdwg.mxu0
    %v197 = vmax.f32 %v194, -0.05
    %v198 = vmin.f32 %v197, 0.05
    %199 = vst [vmem:[#allocation11] sm:$0xff] %v198
    // Predicated region
    $region50: #{tpu_custom_call.1} parent=1 // pred_check
      _
    $region51: #{tpu_custom_call.1} parent=1 // pred_check_branch
      %201 = sbr.rel (0) target = $region53
    $region52: #{tpu_custom_call.1} parent=1 // pred_region
      %203 = vsyncadd [#allocation4], 0
      %s205 = sshll.u32 [#allocation11], 4
      %s206 = int_to_ptr.vmem [resolvable:$true] %s205
      %s207 = sshll.u32 %s7, 4
      %s208 = int_to_ptr.hbm [resolvable:$true] %s207
      %210 = dma.vmem_to_hbm [thread:$0]  %s206, 128, %s208, [#allocation4]
    $region53: #{tpu_custom_call.1} parent=1 // pred_fallthru
      _
    // Predicated region
    $region54: #{tpu_custom_call.1} parent=1 // pred_check
      _
    $region55: #{tpu_custom_call.1} parent=1 // pred_check_branch
      %212 = sbr.rel (0) target = $region57
    $region56: #{tpu_custom_call.1} parent=1 // pred_region
      %214 = dma.done [#allocation4], 128
    $region57: #{tpu_custom_call.1} parent=1 // pred_fallthru
      _
    %215 = vsyncpa [#allocation3], 1
    %216 = vsyncpa [#allocation6], 1
    %217 = vsyncpa [#allocation9], 1
    %218 = vsyncpa [#allocation4], 1

</llo_original>
